<compile_context>
chip_gen: v7x
topology: tpu7x:2x2x1
jax: 0.10.0
libtpu: 0.0.40
codegen_flags: <defaults>
</compile_context>

<pallas_src>
import jax
import jax.numpy as jnp
from jax import lax
from jax.experimental import pallas as pl
from jax.experimental.pallas import tpu as pltpu

EPS = 1e-5
_INV_SQRT2 = 0.7071067811865476


def _num_tensorcores():
    """Best-effort TensorCores-per-device count (v7x has 2; v5e/v6e have 1)."""
    try:
        kind = jax.devices()[0].device_kind.lower()
        if "v7" in kind:
            return 2
    except Exception:
        pass
    return 1


def _metapaths_kernel(x_ref, p_ref, o_ref):
    # x_ref: VMEM (N, H, L)    -- lane-pre-tiled input (L = Cb*W), same block every step
    # p_ref: VMEM (3, L)       -- lane-expanded per-channel affine [a0, a1, c0]
    # o_ref: VMEM (N, H-1, L)  -- lane-dense output slab for this channel block
    h = x_ref.shape[1]

    a0 = p_ref[0, :]
    a1 = p_ref[1, :]
    c0 = p_ref[2, :]

    x = x_ref[...]                 # (N, H, L) f32, full 128-lane vregs
    xt = x[:, : h - 1, :]          # (N, H-1, L)
    xb = x[:, 1:, :]               # (N, H-1, L)

    # Fused conv(2,1) + BatchNorm (training stats) affine, then exact erf GELU.
    z = a0 * xt + a1 * xb + c0
    out = 0.5 * z * (1.0 + lax.erf(z * jnp.float32(_INV_SQRT2)))

    o_ref[...] = out.astype(o_ref.dtype)


def metapaths_forward(x_nchw, conv_w, conv_b, bn_gamma, bn_beta):
    """x_nchw: (N, 1, H, W); conv_w: (C, 1, 2, 1); conv_b / bn_gamma / bn_beta: (C,).

    Returns (N, C, H-1, W), matching Conv2d(k=(2,1)) + BatchNorm2d(train) + GELU.
    conv_b is accepted for API parity but cancels exactly through training-mode BN.
    """
    del conv_b  # cancels through the BN mean subtraction (exact)
    n, cin, h, w = x_nchw.shape
    assert cin == 1
    c_out = conv_w.shape[0]
    h_out = h - 1  # kernel (2,1), stride 1, padding 0, dilation 1

    x = x_nchw[:, 0, :, :].astype(jnp.float32)  # (N, H, W)

    # ---- Hoisted BN batch statistics (channel-independent, centered/two-pass) ----
    xt = x[:, :-1, :]
    xb = x[:, 1:, :]
    m_t = jnp.mean(xt)
    m_b = jnp.mean(xb)
    dt = xt - m_t
    db = xb - m_b
    var_t = jnp.mean(dt * dt)
    var_b = jnp.mean(db * db)
    cov_tb = jnp.mean(dt * db)

    # ---- Per-channel conv+BN affine (scalar algebra in XLA) ----
    w0 = conv_w[:, 0, 0, 0].astype(jnp.float32)   # (C,)
    w1 = conv_w[:, 0, 1, 0].astype(jnp.float32)
    gamma = bn_gamma.astype(jnp.float32)
    beta = bn_beta.astype(jnp.float32)

    var_c = w0 * w0 * var_t + w1 * w1 * var_b + 2.0 * w0 * w1 * cov_tb
    var_c = jnp.maximum(var_c, 0.0)               # guard fp cancellation
    s = gamma / jnp.sqrt(var_c + jnp.float32(EPS))
    a0 = s * w0
    a1 = s * w1
    c0 = beta - s * (w0 * m_t + w1 * m_b)         # conv bias cancels exactly

    # ---- Generation-aware channel split (2 grid steps only with 2 TensorCores) ----
    split = 2 if (_num_tensorcores() >= 2 and c_out % 2 == 0 and c_out >= 2) else 1
    cpb = c_out // split            # channels per block
    lanes = cpb * w                 # lane width of each output slab

    # Lane-expanded params: (3, C*W) = [a0, a1, c0], each channel repeated W lanes.
    p = jnp.stack([a0, a1, c0], axis=0)            # (3, C)
    p_lane = jnp.repeat(p, w, axis=1)              # (3, C*W)

    # Pre-tile x along lanes so every kernel op uses full 128-lane vregs.
    x_tiled = jnp.tile(x, (1, 1, cpb))             # (N, H, lanes)

    out = pl.pallas_call(
        _metapaths_kernel,
        out_shape=jax.ShapeDtypeStruct((n, h_out, c_out * w), jnp.float32),
        grid_spec=pltpu.PrefetchScalarGridSpec(
            num_scalar_prefetch=0,
            grid=(split,),
            in_specs=[
                pl.BlockSpec((n, h, lanes), lambda g: (0, 0, 0)),   # x resident
                pl.BlockSpec((3, lanes), lambda g: (0, g)),          # params per block
            ],
            out_specs=pl.BlockSpec((n, h_out, lanes), lambda g: (0, 0, g)),
        ),
        compiler_params=pltpu.CompilerParams(
            dimension_semantics=("parallel",),
        ),
    )(x_tiled, p_lane)

    # Kernel-native layout is (N, H_out, C*W); relayout to NCHW for parity only.
    out = out.reshape(n, h_out, c_out, w).transpose(0, 2, 1, 3)
    return out


def _reference(x_nchw, conv_w, conv_b, bn_gamma, bn_beta):
    x = x_nchw[:, 0]  # (N, H, W)
    w0 = conv_w[:, 0, 0, 0][None, :, None, None]
    w1 = conv_w[:, 0, 1, 0][None, :, None, None]
    y = (w0 * x[:, None, :-1, :] + w1 * x[:, None, 1:, :]
         + conv_b[None, :, None, None])
    mean = y.mean(axis=(0, 2, 3), keepdims=True)
    var = y.var(axis=(0, 2, 3), keepdims=True)  # biased, as PyTorch BN normalization uses
    y_hat = (y - mean) / jnp.sqrt(var + EPS)
    z = bn_gamma[None, :, None, None] * y_hat + bn_beta[None, :, None, None]
    return 0.5 * z * (1.0 + lax.erf(z / jnp.sqrt(2.0)))


if __name__ == "__main__":
    key = jax.random.PRNGKey(0)
    k_x, k_w, k_b, k_g, k_be = jax.random.split(key, 5)

    N, C_IN, H, W = 2, 1, 16, 16
    C_OUT = 16

    x = jax.random.normal(k_x, (N, C_IN, H, W), dtype=jnp.float32)

    # Deterministic synthetic params (shapes match nn.Conv2d / nn.BatchNorm2d).
    fan_in = C_IN * 2 * 1
    bound = 1.0 / jnp.sqrt(jnp.float32(fan_in))
    conv_w = jax.random.uniform(k_w, (C_OUT, C_IN, 2, 1), jnp.float32, -bound, bound)
    conv_b = jax.random.uniform(k_b, (C_OUT,), jnp.float32, -bound, bound)
    bn_gamma = jnp.ones((C_OUT,), jnp.float32) + 0.1 * jax.random.normal(k_g, (C_OUT,))
    bn_beta = 0.1 * jax.random.normal(k_be, (C_OUT,))

    out = metapaths_forward(x, conv_w, conv_b, bn_gamma, bn_beta)
    out = jax.block_until_ready(out)

    ref = _reference(x, conv_w, conv_b, bn_gamma, bn_beta)
    assert out.shape == (N, C_OUT, H - 1, W)
    assert jnp.allclose(out, ref, atol=1e-4, rtol=1e-4), float(jnp.max(jnp.abs(out - ref)))

    print("KERNEL_OK")
</pallas_src>

<mosaic_0001>
module attributes {stable_mosaic.version = 11 : i64} {
  func.func @_metapaths_kernel(%arg0: i32, %arg1: memref<2x16x256xf32, #tpu.memory_space<vmem>>, %arg2: memref<3x256xf32, #tpu.memory_space<vmem>>, %arg3: memref<2x15x256xf32, #tpu.memory_space<vmem>>) attributes {dimension_semantics = [#tpu.dimension_semantics<parallel>], iteration_bounds = array<i64: 1>, scalar_prefetch = 0 : i64, scratch_operands = 0 : i64, tpu.core_type = #tpu.core_type<tc>, window_params = [{pipeline_mode = #tpu.pipeline_mode<synchronous>, transform_indices = @transform_0, window_bounds = array<i64: 2, 16, 256>}, {transform_indices = @transform_1, window_bounds = array<i64: 3, 256>}, {transform_indices = @transform_2, window_bounds = array<i64: 2, 15, 256>}]} {
    %c0 = arith.constant 0 : index
    %c0_0 = arith.constant 0 : index
    %0 = vector.load %arg2[%c0, %c0_0] : memref<3x256xf32, #tpu.memory_space<vmem>>, vector<1x256xf32>
    %1 = vector.shape_cast %0 : vector<1x256xf32> to vector<256xf32>
    %c1 = arith.constant 1 : index
    %c0_1 = arith.constant 0 : index
    %2 = vector.load %arg2[%c1, %c0_1] : memref<3x256xf32, #tpu.memory_space<vmem>>, vector<1x256xf32>
    %3 = vector.shape_cast %2 : vector<1x256xf32> to vector<256xf32>
    %c2 = arith.constant 2 : index
    %c0_2 = arith.constant 0 : index
    %4 = vector.load %arg2[%c2, %c0_2] : memref<3x256xf32, #tpu.memory_space<vmem>>, vector<1x256xf32>
    %5 = vector.shape_cast %4 : vector<1x256xf32> to vector<256xf32>
    %c0_3 = arith.constant 0 : index
    %c0_4 = arith.constant 0 : index
    %c0_5 = arith.constant 0 : index
    %6 = vector.load %arg1[%c0_3, %c0_4, %c0_5] : memref<2x16x256xf32, #tpu.memory_space<vmem>>, vector<2x16x256xf32>
    %7 = vector.extract_strided_slice %6 {offsets = [0, 0, 0], sizes = [2, 15, 256], strides = [1, 1, 1]} : vector<2x16x256xf32> to vector<2x15x256xf32>
    %8 = vector.extract_strided_slice %6 {offsets = [0, 1, 0], sizes = [2, 15, 256], strides = [1, 1, 1]} : vector<2x16x256xf32> to vector<2x15x256xf32>
    %9 = vector.shape_cast %1 : vector<256xf32> to vector<1x1x256xf32>
    %10 = vector.broadcast %9 : vector<1x1x256xf32> to vector<2x15x256xf32>
    %11 = arith.mulf %10, %7 : vector<2x15x256xf32>
    %12 = vector.shape_cast %3 : vector<256xf32> to vector<1x1x256xf32>
    %13 = vector.broadcast %12 : vector<1x1x256xf32> to vector<2x15x256xf32>
    %14 = arith.mulf %13, %8 : vector<2x15x256xf32>
    %15 = arith.addf %11, %14 : vector<2x15x256xf32>
    %16 = vector.shape_cast %5 : vector<256xf32> to vector<1x1x256xf32>
    %17 = vector.broadcast %16 : vector<1x1x256xf32> to vector<2x15x256xf32>
    %18 = arith.addf %15, %17 : vector<2x15x256xf32>
    %cst = arith.constant 5.000000e-01 : f32
    %19 = vector.broadcast %cst : f32 to vector<2x15x256xf32>
    %20 = arith.mulf %19, %18 : vector<2x15x256xf32>
    %cst_6 = arith.constant 0.707106769 : f32
    %21 = vector.broadcast %cst_6 : f32 to vector<2x15x256xf32>
    %22 = arith.mulf %18, %21 : vector<2x15x256xf32>
    %23 = math.erf %22 : vector<2x15x256xf32>
    %cst_7 = arith.constant 1.000000e+00 : f32
    %24 = vector.broadcast %cst_7 : f32 to vector<2x15x256xf32>
    %25 = arith.addf %24, %23 : vector<2x15x256xf32>
    %26 = arith.mulf %20, %25 : vector<2x15x256xf32>
    %c0_8 = arith.constant 0 : index
    %c0_9 = arith.constant 0 : index
    %c0_10 = arith.constant 0 : index
    %27 = vector.load %arg3[%c0_8, %c0_9, %c0_10] : memref<2x15x256xf32, #tpu.memory_space<vmem>>, vector<2x15x256xf32>
    tpu.vector_store %arg3[%c0_8, %c0_9, %c0_10], %26 {strides = array<i32>} : memref<2x15x256xf32, #tpu.memory_space<vmem>>, vector<2x15x256xf32>,
    return
  }
  func.func @transform_0(%arg0: i32) -> (i32, i32, i32) {
    %c0_i32 = arith.constant 0 : i32
    %c0_i32_0 = arith.constant 0 : i32
    %c0_i32_1 = arith.constant 0 : i32
    %c0_i32_2 = arith.constant 0 : i32
    return %c0_i32, %c0_i32_0, %c0_i32_1 : i32, i32, i32
  }
  func.func @transform_1(%arg0: i32) -> (i32, i32) {
    %c0_i32 = arith.constant 0 : i32
    %c0_i32_0 = arith.constant 0 : i32
    return %c0_i32, %arg0 : i32, i32
  }
  func.func @transform_2(%arg0: i32) -> (i32, i32, i32) {
    %c0_i32 = arith.constant 0 : i32
    %c0_i32_0 = arith.constant 0 : i32
    %c0_i32_1 = arith.constant 0 : i32
    return %c0_i32, %c0_i32_0, %arg0 : i32, i32, i32
  }
}

</mosaic_0001>

<llo_original>
// kernel: tpu_custom_call.1
$region0: #{tpu_custom_call.1}
  #allocation0 [shape = 'u32[]', space=smem, size = 0x4, offset = 0x4, fixed_abs, tag = 'smem constant byte address 0x4 - core index']
  #allocation1 [shape = 'u32[144,128]{1,0:T(1,128)}', space=vmem, size = 0x12000, scoped, tag = 'internal scratch']
  %s0 = inlined_call_operand.hbm [shape: f32[2,16,256], index: 0, kind: input, shape index: {}]
  %s1 = inlined_call_operand.hbm [shape: f32[3,256], index: 1, kind: input, shape index: {}]
  %s2 = inlined_call_operand.vmem [shape: f32[2,15,256], index: 2, kind: output, shape index: {}]
  %s3 = sld [smem:[#allocation0]]
  $region26: #{tpu_custom_call.1} parent=0
    _
  %s5 = ssub.s32 1, %s3
  %s6 = scalar_select 0, %s5, %s3
  $region1: #{tpu_custom_call.1} parent=0
    #allocation2 [shape = 'u8[32768]{0}', space=vmem, size = 0x8000, scoped, tag = 'input window, operand 0, single buffered']
    #allocation3 [shape = 's32[1]{0}', space=sflag, size = 0x4, scoped, tag = 'scoped memory for tpu_custom_call.1']
    #allocation4 [shape = 'u8[4096]{0}', space=vmem, size = 0x1000, scoped, tag = 'input window, operand 1, single buffered']
    #allocation5 [shape = 's32[1]{0}', space=sflag, size = 0x4, scoped, tag = 'scoped memory for tpu_custom_call.1']
    %7 = vsyncpa [#allocation3], 0
    %8 = vsyncpa [#allocation5], 0
    // Predicated region
    $region2: #{tpu_custom_call.1} parent=1 // pred_check
      _
    $region3: #{tpu_custom_call.1} parent=1 // pred_check_branch
      %10 = sbr.rel (0) target = $region5
    $region4: #{tpu_custom_call.1} parent=1 // pred_region
      %s12 = ssub.s32 1024, 1024
      %13 = vsyncadd [#allocation3], %s12
      %s14 = sshll.u32 [#allocation2], 4
      %s15 = int_to_ptr.vmem [resolvable:$true] %s14
      %20 = dma.hbm_to_vmem [thread:$0]  %s0, 1024, %s15, [#allocation3], 256, 256, 16
    $region5: #{tpu_custom_call.1} parent=1 // pred_fallthru
      _
    // Predicated region
    $region6: #{tpu_custom_call.1} parent=1 // pred_check
      _
    $region7: #{tpu_custom_call.1} parent=1 // pred_check_branch
      %22 = sbr.rel (0) target = $region9
    $region8: #{tpu_custom_call.1} parent=1 // pred_region
      %s24 = ssub.s32 128, 128
      %25 = vsyncadd [#allocation5], %s24
      %s27 = sshll.u32 [#allocation4], 4
      %s28 = int_to_ptr.vmem [resolvable:$true] %s27
      %30 = dma.hbm_to_vmem [thread:$0]  %s1, 128, %s28, [#allocation5]
    $region9: #{tpu_custom_call.1} parent=1 // pred_fallthru
      _
    // Predicated region
    $region10: #{tpu_custom_call.1} parent=1 // pred_check
      _
    $region11: #{tpu_custom_call.1} parent=1 // pred_check_branch
      %32 = sbr.rel (0) target = $region13
    $region12: #{tpu_custom_call.1} parent=1 // pred_region
      %33 = dma.done [#allocation3], 1024
    $region13: #{tpu_custom_call.1} parent=1 // pred_fallthru
      _
    // Predicated region
    $region14: #{tpu_custom_call.1} parent=1 // pred_check
      _
    $region15: #{tpu_custom_call.1} parent=1 // pred_check_branch
      %35 = sbr.rel (0) target = $region17
    $region16: #{tpu_custom_call.1} parent=1 // pred_region
      %36 = dma.done [#allocation5], 128
    $region17: #{tpu_custom_call.1} parent=1 // pred_fallthru
      _
    %v37 = vld [vmem:[#allocation4] ss:$4 sm:$0x3]
    %s38 = scalar_lea.vmem [#allocation4], 1
    %v39 = vld [vmem:[%s38] ss:$4 sm:$0x3]
    %s40 = scalar_lea.vmem [#allocation4], 2
    %v41 = vld [vmem:[%s40] ss:$4 sm:$0x3]
    %v42 = vld [vmem:[#allocation2] sm:$0xff]
    %v43 = vld [vmem:[#allocation2 + $0x8] sm:$0xff]
    %v44 = vld [vmem:[#allocation2 + $0x10] sm:$0xff]
    %v45 = vld [vmem:[#allocation2 + $0x18] sm:$0xff]
    %v46 = vld [vmem:[#allocation2 + $0x20] sm:$0xff]
    %v47 = vld [vmem:[#allocation2 + $0x28] sm:$0xff]
    %v48 = vld [vmem:[#allocation2 + $0x30] sm:$0xff]
    %v49 = vld [vmem:[#allocation2 + $0x38] sm:$0xff]
    %v51 = vlaneseq
    %v52 = vshrl.u32 %v51, 7
    %v53 = vsub.s32 0, %v52
    %v54 = vrot.slane %v37, %v53
    %v55 = vlaneseq
    %v56 = vshrl.u32 %v55, 7
    %v57 = vsub.s32 1, %v56
    %v58 = vrot.slane %v37, %v57
    %v61 = vmul.f32 %v54, %v42
    %v62 = vmul.f32 %v58, %v43
    %v63 = vmul.f32 %v54, %v44
    %v64 = vmul.f32 %v58, %v45
    %v65 = vmul.f32 %v54, %v46
    %v66 = vmul.f32 %v58, %v47
    %v67 = vmul.f32 %v54, %v48
    %v68 = vmul.f32 %v58, %v49
    %v70 = vlaneseq
    %v71 = vshrl.u32 %v70, 7
    %v72 = vsub.s32 0, %v71
    %v73 = vrot.slane %v39, %v72
    %v74 = vlaneseq
    %v75 = vshrl.u32 %v74, 7
    %v76 = vsub.s32 1, %v75
    %v77 = vrot.slane %v39, %v76
    %v80 = vmul.f32 %v73, %v42
    %v81 = vmul.f32 %v77, %v43
    %v82 = vmul.f32 %v73, %v44
    %v83 = vmul.f32 %v77, %v45
    %v84 = vmul.f32 %v73, %v46
    %v85 = vmul.f32 %v77, %v47
    %v86 = vmul.f32 %v73, %v48
    %v87 = vmul.f32 %v77, %v49
    %vm96 = vcmask 1046528
    %v97 = vrot.slane %v80, 1
    %v98 = vrot.slane %v82, 1
    %v99 = vsel %vm96, %v97, %v98
    %v100 = vrot.slane %v81, 1
    %v101 = vrot.slane %v83, 1
    %v102 = vsel %vm96, %v100, %v101
    %v103 = vrot.slane %v84, 1
    %v104 = vrot.slane %v86, 1
    %v105 = vsel %vm96, %v103, %v104
    %v106 = vrot.slane %v85, 1
    %v107 = vrot.slane %v87, 1
    %v108 = vsel %vm96, %v106, %v107
    %v117 = vadd.f32 %v61, %v99
    %v118 = vadd.f32 %v62, %v102
    %v119 = vadd.f32 %v63, %v98
    %v120 = vadd.f32 %v64, %v101
    %v121 = vadd.f32 %v65, %v105
    %v122 = vadd.f32 %v66, %v108
    %v123 = vadd.f32 %v67, %v104
    %v124 = vadd.f32 %v68, %v107
    %v126 = vlaneseq
    %v127 = vshrl.u32 %v126, 7
    %v128 = vsub.s32 0, %v127
    %v129 = vrot.slane %v41, %v128
    %v130 = vlaneseq
    %v131 = vshrl.u32 %v130, 7
    %v132 = vsub.s32 1, %v131
    %v133 = vrot.slane %v41, %v132
    %v136 = vadd.f32 %v117, %v129
    %v137 = vadd.f32 %v118, %v133
    %v138 = vadd.f32 %v119, %v129
    %v139 = vadd.f32 %v120, %v133
    %v140 = vadd.f32 %v121, %v129
    %v141 = vadd.f32 %v122, %v133
    %v142 = vadd.f32 %v123, %v129
    %v143 = vadd.f32 %v124, %v133
    %v144 = vmul.f32 %v136, 0.5
    %v145 = vmul.f32 %v137, 0.5
    %v146 = vmul.f32 %v138, 0.5
    %v147 = vmul.f32 %v139, 0.5
    %v148 = vmul.f32 %v140, 0.5
    %v149 = vmul.f32 %v141, 0.5
    %v150 = vmul.f32 %v142, 0.5
    %v151 = vmul.f32 %v143, 0.5
    %v152 = vmul.f32 %v136, 0.70710677
    %v153 = vmul.f32 %v137, 0.70710677
    %v154 = vmul.f32 %v138, 0.70710677
    %v155 = vmul.f32 %v139, 0.70710677
    %v156 = vmul.f32 %v140, 0.70710677
    %v157 = vmul.f32 %v141, 0.70710677
    %v158 = vmul.f32 %v142, 0.70710677
    %v159 = vmul.f32 %v143, 0.70710677
    %v160 = verf.f32.pop %v152
    %v161 = verf.f32.pop %v153
    %v162 = verf.f32.pop %v154
    %v163 = verf.f32.pop %v155
    %v164 = verf.f32.pop %v156
    %v165 = verf.f32.pop %v157
    %v166 = verf.f32.pop %v158
    %v167 = verf.f32.pop %v159
    %v168 = vadd.f32 %v160, 1.0
    %v169 = vadd.f32 %v161, 1.0
    %v170 = vadd.f32 %v162, 1.0
    %v171 = vadd.f32 %v163, 1.0
    %v172 = vadd.f32 %v164, 1.0
    %v173 = vadd.f32 %v165, 1.0
    %v174 = vadd.f32 %v166, 1.0
    %v175 = vadd.f32 %v167, 1.0
    %v176 = vmul.f32 %v144, %v168
    %v177 = vmul.f32 %v145, %v169
    %v178 = vmul.f32 %v146, %v170
    %v179 = vmul.f32 %v147, %v171
    %v180 = vmul.f32 %v148, %v172
    %v181 = vmul.f32 %v149, %v173
    %v182 = vmul.f32 %v150, %v174
    %v183 = vmul.f32 %v151, %v175
    %184 = vst [vmem:[%s2] sm:$0xff] %v176
    %185 = vst [vmem:[%s2 + $0x8] sm:$0xff] %v177
    %186 = vst [vmem:[%s2 + $0x10] sm:$0x7f] %v178
    %187 = vst [vmem:[%s2 + $0x18] sm:$0x7f] %v179
    %188 = vst [vmem:[%s2 + $0x20] sm:$0xff] %v180
    %189 = vst [vmem:[%s2 + $0x28] sm:$0xff] %v181
    %190 = vst [vmem:[%s2 + $0x30] sm:$0x7f] %v182
    %191 = vst [vmem:[%s2 + $0x38] sm:$0x7f] %v183
    // Predicated region
    $region18: #{tpu_custom_call.1} parent=1 // pred_check
      _
    $region19: #{tpu_custom_call.1} parent=1 // pred_check_branch
      %193 = sbr.rel (0) target = $region21
    $region20: #{tpu_custom_call.1} parent=1 // pred_region
      _
    $region21: #{tpu_custom_call.1} parent=1 // pred_fallthru
      _
    // Predicated region
    $region22: #{tpu_custom_call.1} parent=1 // pred_check
      _
    $region23: #{tpu_custom_call.1} parent=1 // pred_check_branch
      %195 = sbr.rel (0) target = $region25
    $region24: #{tpu_custom_call.1} parent=1 // pred_region
      _
    $region25: #{tpu_custom_call.1} parent=1 // pred_fallthru
      _
    %196 = vsyncpa [#allocation3], 1
    %197 = vsyncpa [#allocation5], 1

</llo_original>
